<compile_context>
chip_gen: v6e
topology: v6e:2x2x1
jax: 0.10.0
libtpu: 0.0.40
codegen_flags: <defaults>
</compile_context>

<pallas_src>
import functools

import jax
import jax.numpy as jnp
from jax.experimental import pallas as pl
from jax.experimental.pallas import tpu as pltpu

LANES = 128
VMEM_LIMIT_BYTES = 64 * 1024 * 1024  # fits every generation (v7x has 64 MiB)


def _round_up(x, m):
    return ((x + m - 1) // m) * m


# ----------------------------------------------------------------------------
# Kernels
# ----------------------------------------------------------------------------
def gnn4_fused_kernel(a_ref, x_ref, w_ref, b_ref, o_ref):
    """All four GCN layers fused; every operand fully resident in VMEM.

    a_ref: [Np, Np] bf16 normalized adjacency (zero padded).
    x_ref: [Np, Fp] bf16 node features (zero padded).
    w_ref: [L, Fp, Fp] bf16 packed weights.
    b_ref: [L, 1, Fp] f32 packed biases.
    o_ref: [Np, Fp] f32 output of the last layer.
    """
    a = a_ref[...]
    h = x_ref[...]
    n_layers = w_ref.shape[0]
    for layer in range(n_layers):                      # static unroll
        # transform then aggregate (GCNConv order); bf16 MXU, f32 accumulate
        hw = jnp.dot(h, w_ref[layer], preferred_element_type=jnp.float32)
        out = jnp.dot(a, hw.astype(jnp.bfloat16),
                      preferred_element_type=jnp.float32) + b_ref[layer]
        if layer + 1 < n_layers:
            h = jnp.maximum(out, 0.0).astype(jnp.bfloat16)   # f32 ReLU epilogue
        else:
            o_ref[...] = out.astype(o_ref.dtype)             # no ReLU on last layer


def gcn_layer_tiled_kernel(a_ref, h_ref, w_ref, b_ref, o_ref, *, apply_relu):
    """One GCN layer, one row-tile of A_hat per grid step.

    a_ref: [tm, Np] bf16 row tile of A_hat.
    h_ref: [Np, Fp] bf16 full (resident across the grid).
    w_ref: [Fp, Fp] bf16,  b_ref: [1, Fp] f32.
    o_ref: [tm, Fp] bf16 (hidden layers) / f32 (last layer).
    """
    # (A @ H) @ W: avoids recomputing H @ W for every row tile.
    g = jnp.dot(a_ref[...], h_ref[...], preferred_element_type=jnp.float32)
    out = jnp.dot(g.astype(jnp.bfloat16), w_ref[...],
                  preferred_element_type=jnp.float32) + b_ref[...]
    if apply_relu:
        out = jnp.maximum(out, 0.0)
    o_ref[...] = out.astype(o_ref.dtype)


# ----------------------------------------------------------------------------
# Host-side packing / wrapper
# ----------------------------------------------------------------------------
def pack_params(params, fp):
    """Zero-pad each (W [din,dout], b [dout]) to [Fp,Fp]/[Fp] and stack."""
    w_pad, b_pad = [], []
    for w, b in params:
        din, dout = w.shape
        wp = jnp.zeros((fp, fp), jnp.float32).at[:din, :dout].set(w)
        bp = jnp.zeros((fp,), jnp.float32).at[:dout].set(b)
        w_pad.append(wp)
        b_pad.append(bp)
    w_stack = jnp.stack(w_pad).astype(jnp.bfloat16)          # [L, Fp, Fp] bf16
    b_stack = jnp.stack(b_pad).reshape(len(params), 1, fp)    # [L, 1, Fp] f32
    return w_stack, b_stack


def gnn_model4_forward(x, a_hat, params, *, use_row_tiling=False, tm=LANES):
    """x: [N, input_dim] f32, a_hat: [N, N] f32, params: list of (W, b)."""
    n, input_dim = x.shape
    out_dim = params[-1][0].shape[1]
    dims = [input_dim] + [w.shape[1] for w, _ in params]
    fp = _round_up(max(dims), LANES)          # padded feature width
    np_ = _round_up(n, LANES)                 # padded node count

    a_pad = jnp.zeros((np_, np_), jnp.float32).at[:n, :n].set(a_hat)
    a_pad = a_pad.astype(jnp.bfloat16)
    x_pad = jnp.zeros((np_, fp), jnp.float32).at[:n, :input_dim].set(x)
    x_pad = x_pad.astype(jnp.bfloat16)
    w_stack, b_stack = pack_params(params, fp)

    if not use_row_tiling:
        # Fully fused, everything resident in VMEM (small / medium graphs).
        vmem = pl.BlockSpec(memory_space=pltpu.MemorySpace.VMEM)
        out_pad = pl.pallas_call(
            gnn4_fused_kernel,
            out_shape=jax.ShapeDtypeStruct((np_, fp), jnp.float32),
            in_specs=[vmem, vmem, vmem, vmem],
            out_specs=vmem,
            compiler_params=pltpu.CompilerParams(
                vmem_limit_bytes=VMEM_LIMIT_BYTES),
        )(a_pad, x_pad, w_stack, b_stack)
    else:
        # Scalable path: per-layer pallas_call, grid over A_hat row tiles.
        tm = min(tm, np_)
        assert np_ % tm == 0
        n_layers = len(params)
        h = x_pad
        for layer in range(n_layers):
            last = layer == n_layers - 1
            out_dtype = jnp.float32 if last else jnp.bfloat16
            kernel = functools.partial(gcn_layer_tiled_kernel,
                                       apply_relu=not last)
            h = pl.pallas_call(
                kernel,
                out_shape=jax.ShapeDtypeStruct((np_, fp), out_dtype),
                grid=(np_ // tm,),
                in_specs=[
                    pl.BlockSpec((tm, np_), lambda i: (i, 0)),   # A row tile
                    pl.BlockSpec((np_, fp), lambda i: (0, 0)),   # H resident
                    pl.BlockSpec((fp, fp), lambda i: (0, 0)),    # W resident
                    pl.BlockSpec((1, fp), lambda i: (0, 0)),     # b resident
                ],
                out_specs=pl.BlockSpec((tm, fp), lambda i: (i, 0)),
                compiler_params=pltpu.CompilerParams(
                    dimension_semantics=("parallel",),
                    vmem_limit_bytes=VMEM_LIMIT_BYTES),
            )(a_pad, h, w_stack[layer], b_stack[layer])
        out_pad = h

    return out_pad[:n, :out_dim]


# ----------------------------------------------------------------------------
# Plain-JAX glue: adjacency normalization, param init, f32 reference
# ----------------------------------------------------------------------------
def build_normalized_adjacency(edge_index, num_nodes):
    """Dense GCN normalization: D^{-1/2} (A + I) D^{-1/2}."""
    src, dst = edge_index[0], edge_index[1]
    adj = jnp.zeros((num_nodes, num_nodes), jnp.float32)
    adj = adj.at[dst, src].max(1.0)                           # ignore duplicates
    adj = adj + jnp.eye(num_nodes, dtype=jnp.float32)         # self-loops
    deg = adj.sum(axis=1)
    dinv_sqrt = jnp.where(deg > 0, 1.0 / jnp.sqrt(deg), 0.0)
    return dinv_sqrt[:, None] * adj * dinv_sqrt[None, :]


def init_gcn_params(key, dims):
    """Deterministic glorot-uniform weights [in, out] and zero biases."""
    params = []
    for i, (din, dout) in enumerate(zip(dims[:-1], dims[1:])):
        k = jax.random.fold_in(key, i)
        limit = jnp.sqrt(6.0 / (din + dout))
        w = jax.random.uniform(k, (din, dout), jnp.float32, -limit, limit)
        b = jnp.zeros((dout,), jnp.float32)
        params.append((w, b))
    return params


def reference_forward(x, a_hat, params):
    h = x
    for i, (w, b) in enumerate(params):
        h = a_hat @ (h @ w) + b
        if i < len(params) - 1:
            h = jnp.maximum(h, 0.0)
    return h


# ----------------------------------------------------------------------------
# Test
# ----------------------------------------------------------------------------
if __name__ == "__main__":
    N = 16            # number of graph nodes
    INPUT_DIM = 8
    HIDDEN_DIM = 32
    OUTPUT_DIM = 4

    key = jax.random.PRNGKey(0)
    kx, ke, kp = jax.random.split(key, 3)

    # Node features (data.x)
    x = jax.random.normal(kx, (N, INPUT_DIM), jnp.float32)

    # edge_index (data.edge_index): ring plus random edges, made symmetric
    ring_src = jnp.arange(N, dtype=jnp.int32)
    ring_dst = (ring_src + 1) % N
    rnd = jax.random.randint(ke, (2, 12), 0, N, dtype=jnp.int32)
    src = jnp.concatenate([ring_src, ring_dst, rnd[0], rnd[1]])
    dst = jnp.concatenate([ring_dst, ring_src, rnd[1], rnd[0]])
    edge_index = jnp.stack([src, dst])          # shape (2, E)

    a_hat = build_normalized_adjacency(edge_index, N)
    params = init_gcn_params(
        kp, [INPUT_DIM, HIDDEN_DIM, HIDDEN_DIM, HIDDEN_DIM, OUTPUT_DIM])

    ref = reference_forward(x, a_hat, params)   # f32 reference

    # Fused single-kernel path (small-graph fast path).
    out_fused = jax.block_until_ready(
        gnn_model4_forward(x, a_hat, params, use_row_tiling=False))

    # Row-tiled per-layer path (scalable / v7x path) -- same answer.
    out_tiled = jax.block_until_ready(
        gnn_model4_forward(x, a_hat, params, use_row_tiling=True, tm=LANES))

    assert out_fused.shape == (N, OUTPUT_DIM)
    assert out_tiled.shape == (N, OUTPUT_DIM)
    # bf16 MXU inputs with f32 accumulation: compare to f32 reference loosely.
    assert jnp.allclose(out_fused, ref, atol=3e-2, rtol=3e-2), "fused mismatch"
    assert jnp.allclose(out_tiled, ref, atol=3e-2, rtol=3e-2), "tiled mismatch"

    print("KERNEL_OK")
</pallas_src>

<mosaic_0001>
module attributes {stable_mosaic.version = 11 : i64} {
  func.func @gnn4_fused_kernel(%arg0: memref<128x128xbf16, #tpu.memory_space<vmem>>, %arg1: memref<128x128xbf16, #tpu.memory_space<vmem>>, %arg2: memref<4x128x128xbf16, #tpu.memory_space<vmem>>, %arg3: memref<4x1x128xf32, #tpu.memory_space<vmem>>, %arg4: memref<128x128xf32, #tpu.memory_space<vmem>>) attributes {dimension_semantics = [], scalar_prefetch = 0 : i64, scratch_operands = 0 : i64, tpu.core_type = #tpu.core_type<tc>} {
    %c0 = arith.constant 0 : index
    %c0_0 = arith.constant 0 : index
    %0 = vector.load %arg0[%c0, %c0_0] : memref<128x128xbf16, #tpu.memory_space<vmem>>, vector<128x128xbf16>
    %c0_1 = arith.constant 0 : index
    %c0_2 = arith.constant 0 : index
    %1 = vector.load %arg1[%c0_1, %c0_2] : memref<128x128xbf16, #tpu.memory_space<vmem>>, vector<128x128xbf16>
    %c0_3 = arith.constant 0 : index
    %c0_4 = arith.constant 0 : index
    %c0_5 = arith.constant 0 : index
    %2 = vector.load %arg2[%c0_3, %c0_4, %c0_5] : memref<4x128x128xbf16, #tpu.memory_space<vmem>>, vector<1x128x128xbf16>
    %3 = vector.shape_cast %2 : vector<1x128x128xbf16> to vector<128x128xbf16>
    %cst = arith.constant dense<0.000000e+00> : vector<128x128xf32>
    %4 = tpu.matmul %1, %3, %cst {dimension_numbers = #tpu.dot_dimension_numbers<[1], [0], [0], [1], [0, 0, 1, 1], [], []>} : vector<128x128xbf16>, vector<128x128xbf16>, vector<128x128xf32> -> vector<128x128xf32>
    %5 = arith.truncf %4 : vector<128x128xf32> to vector<128x128xbf16>
    %cst_6 = arith.constant dense<0.000000e+00> : vector<128x128xf32>
    %6 = tpu.matmul %0, %5, %cst_6 {dimension_numbers = #tpu.dot_dimension_numbers<[1], [0], [0], [1], [0, 0, 1, 1], [], []>} : vector<128x128xbf16>, vector<128x128xbf16>, vector<128x128xf32> -> vector<128x128xf32>
    %c0_7 = arith.constant 0 : index
    %c0_8 = arith.constant 0 : index
    %c0_9 = arith.constant 0 : index
    %7 = vector.load %arg3[%c0_7, %c0_8, %c0_9] : memref<4x1x128xf32, #tpu.memory_space<vmem>>, vector<1x1x128xf32>
    %8 = vector.shape_cast %7 : vector<1x1x128xf32> to vector<1x128xf32>
    %9 = vector.broadcast %8 : vector<1x128xf32> to vector<128x128xf32>
    %10 = arith.addf %6, %9 : vector<128x128xf32>
    %cst_10 = arith.constant 0.000000e+00 : f32
    %11 = vector.broadcast %cst_10 : f32 to vector<128x128xf32>
    %12 = arith.maximumf %10, %11 : vector<128x128xf32>
    %13 = arith.truncf %12 : vector<128x128xf32> to vector<128x128xbf16>
    %c1 = arith.constant 1 : index
    %c0_11 = arith.constant 0 : index
    %c0_12 = arith.constant 0 : index
    %14 = vector.load %arg2[%c1, %c0_11, %c0_12] : memref<4x128x128xbf16, #tpu.memory_space<vmem>>, vector<1x128x128xbf16>
    %15 = vector.shape_cast %14 : vector<1x128x128xbf16> to vector<128x128xbf16>
    %cst_13 = arith.constant dense<0.000000e+00> : vector<128x128xf32>
    %16 = tpu.matmul %13, %15, %cst_13 {dimension_numbers = #tpu.dot_dimension_numbers<[1], [0], [0], [1], [0, 0, 1, 1], [], []>} : vector<128x128xbf16>, vector<128x128xbf16>, vector<128x128xf32> -> vector<128x128xf32>
    %17 = arith.truncf %16 : vector<128x128xf32> to vector<128x128xbf16>
    %cst_14 = arith.constant dense<0.000000e+00> : vector<128x128xf32>
    %18 = tpu.matmul %0, %17, %cst_14 {dimension_numbers = #tpu.dot_dimension_numbers<[1], [0], [0], [1], [0, 0, 1, 1], [], []>} : vector<128x128xbf16>, vector<128x128xbf16>, vector<128x128xf32> -> vector<128x128xf32>
    %c1_15 = arith.constant 1 : index
    %c0_16 = arith.constant 0 : index
    %c0_17 = arith.constant 0 : index
    %19 = vector.load %arg3[%c1_15, %c0_16, %c0_17] : memref<4x1x128xf32, #tpu.memory_space<vmem>>, vector<1x1x128xf32>
    %20 = vector.shape_cast %19 : vector<1x1x128xf32> to vector<1x128xf32>
    %21 = vector.broadcast %20 : vector<1x128xf32> to vector<128x128xf32>
    %22 = arith.addf %18, %21 : vector<128x128xf32>
    %cst_18 = arith.constant 0.000000e+00 : f32
    %23 = vector.broadcast %cst_18 : f32 to vector<128x128xf32>
    %24 = arith.maximumf %22, %23 : vector<128x128xf32>
    %25 = arith.truncf %24 : vector<128x128xf32> to vector<128x128xbf16>
    %c2 = arith.constant 2 : index
    %c0_19 = arith.constant 0 : index
    %c0_20 = arith.constant 0 : index
    %26 = vector.load %arg2[%c2, %c0_19, %c0_20] : memref<4x128x128xbf16, #tpu.memory_space<vmem>>, vector<1x128x128xbf16>
    %27 = vector.shape_cast %26 : vector<1x128x128xbf16> to vector<128x128xbf16>
    %cst_21 = arith.constant dense<0.000000e+00> : vector<128x128xf32>
    %28 = tpu.matmul %25, %27, %cst_21 {dimension_numbers = #tpu.dot_dimension_numbers<[1], [0], [0], [1], [0, 0, 1, 1], [], []>} : vector<128x128xbf16>, vector<128x128xbf16>, vector<128x128xf32> -> vector<128x128xf32>
    %29 = arith.truncf %28 : vector<128x128xf32> to vector<128x128xbf16>
    %cst_22 = arith.constant dense<0.000000e+00> : vector<128x128xf32>
    %30 = tpu.matmul %0, %29, %cst_22 {dimension_numbers = #tpu.dot_dimension_numbers<[1], [0], [0], [1], [0, 0, 1, 1], [], []>} : vector<128x128xbf16>, vector<128x128xbf16>, vector<128x128xf32> -> vector<128x128xf32>
    %c2_23 = arith.constant 2 : index
    %c0_24 = arith.constant 0 : index
    %c0_25 = arith.constant 0 : index
    %31 = vector.load %arg3[%c2_23, %c0_24, %c0_25] : memref<4x1x128xf32, #tpu.memory_space<vmem>>, vector<1x1x128xf32>
    %32 = vector.shape_cast %31 : vector<1x1x128xf32> to vector<1x128xf32>
    %33 = vector.broadcast %32 : vector<1x128xf32> to vector<128x128xf32>
    %34 = arith.addf %30, %33 : vector<128x128xf32>
    %cst_26 = arith.constant 0.000000e+00 : f32
    %35 = vector.broadcast %cst_26 : f32 to vector<128x128xf32>
    %36 = arith.maximumf %34, %35 : vector<128x128xf32>
    %37 = arith.truncf %36 : vector<128x128xf32> to vector<128x128xbf16>
    %c3 = arith.constant 3 : index
    %c0_27 = arith.constant 0 : index
    %c0_28 = arith.constant 0 : index
    %38 = vector.load %arg2[%c3, %c0_27, %c0_28] : memref<4x128x128xbf16, #tpu.memory_space<vmem>>, vector<1x128x128xbf16>
    %39 = vector.shape_cast %38 : vector<1x128x128xbf16> to vector<128x128xbf16>
    %cst_29 = arith.constant dense<0.000000e+00> : vector<128x128xf32>
    %40 = tpu.matmul %37, %39, %cst_29 {dimension_numbers = #tpu.dot_dimension_numbers<[1], [0], [0], [1], [0, 0, 1, 1], [], []>} : vector<128x128xbf16>, vector<128x128xbf16>, vector<128x128xf32> -> vector<128x128xf32>
    %41 = arith.truncf %40 : vector<128x128xf32> to vector<128x128xbf16>
    %cst_30 = arith.constant dense<0.000000e+00> : vector<128x128xf32>
    %42 = tpu.matmul %0, %41, %cst_30 {dimension_numbers = #tpu.dot_dimension_numbers<[1], [0], [0], [1], [0, 0, 1, 1], [], []>} : vector<128x128xbf16>, vector<128x128xbf16>, vector<128x128xf32> -> vector<128x128xf32>
    %c3_31 = arith.constant 3 : index
    %c0_32 = arith.constant 0 : index
    %c0_33 = arith.constant 0 : index
    %43 = vector.load %arg3[%c3_31, %c0_32, %c0_33] : memref<4x1x128xf32, #tpu.memory_space<vmem>>, vector<1x1x128xf32>
    %44 = vector.shape_cast %43 : vector<1x1x128xf32> to vector<1x128xf32>
    %45 = vector.broadcast %44 : vector<1x128xf32> to vector<128x128xf32>
    %46 = arith.addf %42, %45 : vector<128x128xf32>
    %c0_34 = arith.constant 0 : index
    %c0_35 = arith.constant 0 : index
    %47 = vector.load %arg4[%c0_34, %c0_35] : memref<128x128xf32, #tpu.memory_space<vmem>>, vector<128x128xf32>
    tpu.vector_store %arg4[%c0_34, %c0_35], %46 {strides = array<i32>} : memref<128x128xf32, #tpu.memory_space<vmem>>, vector<128x128xf32>,
    return
  }
}

</mosaic_0001>

<llo_original>
// kernel: tpu_custom_call.1
$region0: #{tpu_custom_call.1}
  #allocation0 [shape = 'u32[]', space=smem, size = 0x4, offset = 0x4, fixed_abs, tag = 'smem constant byte address 0x4 - core index']
  #allocation1 [shape = 'u32[144,128]{1,0:T(1,128)}', space=vmem, size = 0x12000, scoped, tag = 'internal scratch']
  %s0 = inlined_call_operand.hbm [shape: bf16[128,128], index: 0, kind: input, shape index: {}]
  %s1 = inlined_call_operand.hbm [shape: bf16[128,128], index: 1, kind: input, shape index: {}]
  %s2 = inlined_call_operand.hbm [shape: bf16[4,128,128], index: 2, kind: input, shape index: {}]
  %s3 = inlined_call_operand.vmem [shape: f32[4,1,128], index: 3, kind: input, shape index: {}]
  %s4 = inlined_call_operand.hbm [shape: f32[128,128], index: 4, kind: output, shape index: {}]
  %s5 = sld [smem:[#allocation0]]
  $region38: #{tpu_custom_call.1} parent=0
    _
  %s7 = ssub.s32 1, %s5
  %s8 = scalar_select 0, %s7, %s5
  $region1: #{tpu_custom_call.1} parent=0
    #allocation2 [shape = 'u8[32768]{0}', space=vmem, size = 0x8000, scoped, tag = 'input window, operand 0, single buffered']
    #allocation3 [shape = 's32[1]{0}', space=sflag, size = 0x4, scoped, tag = 'scoped memory for tpu_custom_call.1']
    #allocation4 [shape = 's32[1]{0}', space=sflag, size = 0x4, scoped, tag = 'scoped memory for tpu_custom_call.1']
    #allocation5 [shape = 'u8[32768]{0}', space=vmem, size = 0x8000, scoped, tag = 'input window, operand 1, single buffered']
    #allocation6 [shape = 's32[1]{0}', space=sflag, size = 0x4, scoped, tag = 'scoped memory for tpu_custom_call.1']
    #allocation7 [shape = 'u8[131072]{0}', space=vmem, size = 0x20000, scoped, tag = 'input window, operand 2, single buffered']
    #allocation8 [shape = 'u8[65536]{0}', space=vmem, size = 0x10000, scoped, tag = 'output window, operand 0, single buffered']
    %9 = vsyncpa [#allocation3], 0
    %10 = vsyncpa [#allocation6], 0
    %11 = vsyncpa [#allocation4], 0
    // Predicated region
    $region2: #{tpu_custom_call.1} parent=1 // pred_check
      _
    $region3: #{tpu_custom_call.1} parent=1 // pred_check_branch
      %13 = sbr.rel (0) target = $region5
    $region4: #{tpu_custom_call.1} parent=1 // pred_region
      %s15 = ssub.s32 1024, 1024
      %16 = vsyncadd [#allocation3], %s15
      %s17 = sshll.u32 [#allocation2], 4
      %s18 = int_to_ptr.vmem [resolvable:$true] %s17
      %23 = dma.hbm_to_vmem [thread:$0]  %s0, 1024, %s18, [#allocation3], 64, 64, 4
    $region5: #{tpu_custom_call.1} parent=1 // pred_fallthru
      _
    // Predicated region
    $region6: #{tpu_custom_call.1} parent=1 // pred_check
      _
    $region7: #{tpu_custom_call.1} parent=1 // pred_check_branch
      %25 = sbr.rel (0) target = $region9
    $region8: #{tpu_custom_call.1} parent=1 // pred_region
      %s27 = ssub.s32 1024, 1024
      %28 = vsyncadd [#allocation6], %s27
      %s29 = sshll.u32 [#allocation5], 4
      %s30 = int_to_ptr.vmem [resolvable:$true] %s29
      %35 = dma.hbm_to_vmem [thread:$0]  %s1, 1024, %s30, [#allocation6], 64, 64, 4
    $region9: #{tpu_custom_call.1} parent=1 // pred_fallthru
      _
    // Predicated region
    $region10: #{tpu_custom_call.1} parent=1 // pred_check
      _
    $region11: #{tpu_custom_call.1} parent=1 // pred_check_branch
      %37 = sbr.rel (0) target = $region13
    $region12: #{tpu_custom_call.1} parent=1 // pred_region
      %s39 = ssub.s32 4096, 4096
      %40 = vsyncadd [#allocation6], %s39
      %s41 = sshll.u32 [#allocation7], 4
      %s42 = int_to_ptr.vmem [resolvable:$true] %s41
      %47 = dma.hbm_to_vmem [thread:$0]  %s2, 4096, %s42, [#allocation6], 64, 64, 4
    $region13: #{tpu_custom_call.1} parent=1 // pred_fallthru
      _
    // Predicated region
    $region14: #{tpu_custom_call.1} parent=1 // pred_check
      _
    $region15: #{tpu_custom_call.1} parent=1 // pred_check_branch
      %49 = sbr.rel (0) target = $region17
    $region16: #{tpu_custom_call.1} parent=1 // pred_region
      _
    $region17: #{tpu_custom_call.1} parent=1 // pred_fallthru
      _
    // Predicated region
    $region18: #{tpu_custom_call.1} parent=1 // pred_check
      _
    $region19: #{tpu_custom_call.1} parent=1 // pred_check_branch
      %51 = sbr.rel (0) target = $region21
    $region20: #{tpu_custom_call.1} parent=1 // pred_region
      %52 = dma.done [#allocation3], 1024
    $region21: #{tpu_custom_call.1} parent=1 // pred_fallthru
      _
    // Predicated region
    $region22: #{tpu_custom_call.1} parent=1 // pred_check
      _
    $region23: #{tpu_custom_call.1} parent=1 // pred_check_branch
      %54 = sbr.rel (0) target = $region25
    $region24: #{tpu_custom_call.1} parent=1 // pred_region
      %55 = dma.done [#allocation6], 1024
    $region25: #{tpu_custom_call.1} parent=1 // pred_fallthru
      _
    // Predicated region
    $region26: #{tpu_custom_call.1} parent=1 // pred_check
      _
    $region27: #{tpu_custom_call.1} parent=1 // pred_check_branch
      %57 = sbr.rel (0) target = $region29
    $region28: #{tpu_custom_call.1} parent=1 // pred_region
      %58 = dma.done [#allocation6], 4096
    $region29: #{tpu_custom_call.1} parent=1 // pred_fallthru
      _
    %v60 = vld [vmem:[#allocation2] sm:$0xf]
    %v61 = vld [vmem:[#allocation2 + $0x4] sm:$0xf]
    %v62 = vld [vmem:[#allocation2 + $0x8] sm:$0xf]
    %v63 = vld [vmem:[#allocation2 + $0xc] sm:$0xf]
    %v64 = vld [vmem:[#allocation2 + $0x10] sm:$0xf]
    %v65 = vld [vmem:[#allocation2 + $0x14] sm:$0xf]
    %v66 = vld [vmem:[#allocation2 + $0x18] sm:$0xf]
    %v67 = vld [vmem:[#allocation2 + $0x1c] sm:$0xf]
    %v68 = vld [vmem:[#allocation2 + $0x20] sm:$0xf]
    %v69 = vld [vmem:[#allocation2 + $0x24] sm:$0xf]
    %v70 = vld [vmem:[#allocation2 + $0x28] sm:$0xf]
    %v71 = vld [vmem:[#allocation2 + $0x2c] sm:$0xf]
    %v72 = vld [vmem:[#allocation2 + $0x30] sm:$0xf]
    %v73 = vld [vmem:[#allocation2 + $0x34] sm:$0xf]
    %v74 = vld [vmem:[#allocation2 + $0x38] sm:$0xf]
    %v75 = vld [vmem:[#allocation2 + $0x3c] sm:$0xf]
    %v76 = vld [vmem:[#allocation5] sm:$0xf]
    %v77 = vld [vmem:[#allocation5 + $0x4] sm:$0xf]
    %v78 = vld [vmem:[#allocation5 + $0x8] sm:$0xf]
    %v79 = vld [vmem:[#allocation5 + $0xc] sm:$0xf]
    %v80 = vld [vmem:[#allocation5 + $0x10] sm:$0xf]
    %v81 = vld [vmem:[#allocation5 + $0x14] sm:$0xf]
    %v82 = vld [vmem:[#allocation5 + $0x18] sm:$0xf]
    %v83 = vld [vmem:[#allocation5 + $0x1c] sm:$0xf]
    %v84 = vld [vmem:[#allocation5 + $0x20] sm:$0xf]
    %v85 = vld [vmem:[#allocation5 + $0x24] sm:$0xf]
    %v86 = vld [vmem:[#allocation5 + $0x28] sm:$0xf]
    %v87 = vld [vmem:[#allocation5 + $0x2c] sm:$0xf]
    %v88 = vld [vmem:[#allocation5 + $0x30] sm:$0xf]
    %v89 = vld [vmem:[#allocation5 + $0x34] sm:$0xf]
    %v90 = vld [vmem:[#allocation5 + $0x38] sm:$0xf]
    %v91 = vld [vmem:[#allocation5 + $0x3c] sm:$0xf]
    %v92 = vld [vmem:[#allocation7] sm:$0xf]
    %v93 = vld [vmem:[#allocation7 + $0x4] sm:$0xf]
    %v94 = vld [vmem:[#allocation7 + $0x8] sm:$0xf]
    %v95 = vld [vmem:[#allocation7 + $0xc] sm:$0xf]
    %v96 = vld [vmem:[#allocation7 + $0x10] sm:$0xf]
    %v97 = vld [vmem:[#allocation7 + $0x14] sm:$0xf]
    %v98 = vld [vmem:[#allocation7 + $0x18] sm:$0xf]
    %v99 = vld [vmem:[#allocation7 + $0x1c] sm:$0xf]
    %v100 = vld [vmem:[#allocation7 + $0x20] sm:$0xf]
    %v101 = vld [vmem:[#allocation7 + $0x24] sm:$0xf]
    %v102 = vld [vmem:[#allocation7 + $0x28] sm:$0xf]
    %v103 = vld [vmem:[#allocation7 + $0x2c] sm:$0xf]
    %v104 = vld [vmem:[#allocation7 + $0x30] sm:$0xf]
    %v105 = vld [vmem:[#allocation7 + $0x34] sm:$0xf]
    %v106 = vld [vmem:[#allocation7 + $0x38] sm:$0xf]
    %v107 = vld [vmem:[#allocation7 + $0x3c] sm:$0xf]
    %v124 = vunpack.c.l.b16 %v76
    %v125 = vunpack.c.l.b16 %v77
    %v126 = vunpack.c.l.b16 %v78
    %v127 = vunpack.c.l.b16 %v79
    %v128 = vunpack.c.l.b16 %v80
    %v129 = vunpack.c.l.b16 %v81
    %v130 = vunpack.c.l.b16 %v82
    %v131 = vunpack.c.l.b16 %v83
    %v132 = vunpack.c.l.b16 %v84
    %v133 = vunpack.c.l.b16 %v85
    %v134 = vunpack.c.l.b16 %v86
    %v135 = vunpack.c.l.b16 %v87
    %v136 = vunpack.c.l.b16 %v88
    %v137 = vunpack.c.l.b16 %v89
    %v138 = vunpack.c.l.b16 %v90
    %v139 = vunpack.c.l.b16 %v91
    %v140 = vpack.c.b16 %v125, %v124
    %v141 = vpack.c.b16 %v127, %v126
    %v142 = vpack.c.b16 %v129, %v128
    %v143 = vpack.c.b16 %v131, %v130
    %v144 = vpack.c.b16 %v133, %v132
    %v145 = vpack.c.b16 %v135, %v134
    %v146 = vpack.c.b16 %v137, %v136
    %v147 = vpack.c.b16 %v139, %v138
    %v172 = vunpack.c.l.b16 %v92
    %v173 = vunpack.c.l.b16 %v93
    %v174 = vunpack.c.l.b16 %v94
    %v175 = vunpack.c.l.b16 %v95
    %v176 = vunpack.c.l.b16 %v96
    %v177 = vunpack.c.l.b16 %v97
    %v178 = vunpack.c.l.b16 %v98
    %v179 = vunpack.c.l.b16 %v99
    %v180 = vunpack.c.l.b16 %v100
    %v181 = vunpack.c.l.b16 %v101
    %v182 = vunpack.c.l.b16 %v102
    %v183 = vunpack.c.l.b16 %v103
    %v184 = vunpack.c.l.b16 %v104
    %v185 = vunpack.c.l.b16 %v105
    %v186 = vunpack.c.l.b16 %v106
    %v187 = vunpack.c.l.b16 %v107
    %v188 = vpack.c.b16 %v173, %v172
    %v189 = vpack.c.b16 %v175, %v174
    %v190 = vpack.c.b16 %v177, %v176
    %v191 = vpack.c.b16 %v179, %v178
    %v192 = vpack.c.b16 %v181, %v180
    %v193 = vpack.c.b16 %v183, %v182
    %v194 = vpack.c.b16 %v185, %v184
    %v195 = vpack.c.b16 %v187, %v186
    %204 = vmatprep.subr.bf16.mxu0 0
    %205 = vmatpush1.bf16.msra.mxu0 %v195
    %206 = vmatprep.subr.bf16.mxu0 0
    %207 = vmatpush1.bf16.msra.mxu0 %v194
    %208 = vmatprep.subr.bf16.mxu0 0
    %209 = vmatpush1.bf16.msra.mxu0 %v193
    %210 = vmatprep.subr.bf16.mxu0 0
    %211 = vmatpush1.bf16.msra.mxu0 %v192
    %212 = vmatprep.subr.bf16.mxu0 0
    %213 = vmatpush1.bf16.msra.mxu0 %v191
    %214 = vmatprep.subr.bf16.mxu0 0
    %215 = vmatpush1.bf16.msra.mxu0 %v190
    %216 = vmatprep.subr.bf16.mxu0 0
    %217 = vmatpush1.bf16.msra.mxu0 %v189
    %218 = vmatprep.subr.bf16.mxu0 0
    %219 = vmatpush1.bf16.msra.mxu0 %v188
    %220 = vmatprep.subr.bf16.mxu0 0
    %221 = vmatpush2.bf16.msra.mxu0 0
    %222 = vmatprep.subr.bf16.mxu0 0
    %223 = vmatpush2.bf16.msra.mxu0 0
    %224 = vmatprep.subr.bf16.mxu0 0
    %225 = vmatpush2.bf16.msra.mxu0 0
    %226 = vmatprep.subr.bf16.mxu0 0
    %227 = vmatpush2.bf16.msra.mxu0 0
    %228 = vmatprep.subr.bf16.mxu0 0
    %229 = vmatpush2.bf16.msra.mxu0 0
    %230 = vmatprep.subr.bf16.mxu0 0
    %231 = vmatpush2.bf16.msra.mxu0 0
    %232 = vmatprep.subr.bf16.mxu0 0
    %233 = vmatpush2.bf16.msra.mxu0 0
    %234 = vmatprep.subr.bf16.mxu0 0
    %235 = vmatpush2.bf16.msra.mxu0 0
    %236 = vmatprep.mubr.bf16.mxu0 0
    %237 = vmatmul.mubr.bf16.gmra.mxu0 %v140
    %v238 = vpop.f32.mrf.mxu0
    %v239 = vadd.f32 0.0, %v238
    %v240 = vpop.f32.mrf.mxu0
    %v241 = vpop.f32.mrf.mxu0
    %v242 = vadd.f32 0.0, %v241
    %v243 = vpop.f32.mrf.mxu0
    %244 = vmatprep.mubr.bf16.mxu0 0
    %245 = vmatmul.mubr.bf16.gmra.mxu0 %v141
    %v246 = vpop.f32.mrf.mxu0
    %v247 = vadd.f32 0.0, %v246
    %v248 = vpop.f32.mrf.mxu0
    %v249 = vpop.f32.mrf.mxu0
    %v250 = vadd.f32 0.0, %v249
    %v251 = vpop.f32.mrf.mxu0
    %252 = vmatprep.mubr.bf16.mxu0 0
    %253 = vmatmul.mubr.bf16.gmra.mxu0 %v142
    %v254 = vpop.f32.mrf.mxu0
    %v255 = vadd.f32 0.0, %v254
    %v256 = vpop.f32.mrf.mxu0
    %v257 = vpop.f32.mrf.mxu0
    %v258 = vadd.f32 0.0, %v257
    %v259 = vpop.f32.mrf.mxu0
    %260 = vmatprep.mubr.bf16.mxu0 0
    %261 = vmatmul.mubr.bf16.gmra.mxu0 %v143
    %v262 = vpop.f32.mrf.mxu0
    %v263 = vadd.f32 0.0, %v262
    %v264 = vpop.f32.mrf.mxu0
    %v265 = vpop.f32.mrf.mxu0
    %v266 = vadd.f32 0.0, %v265
    %v267 = vpop.f32.mrf.mxu0
    %268 = vmatprep.mubr.bf16.mxu0 0
    %269 = vmatmul.mubr.bf16.gmra.mxu0 %v144
    %v270 = vpop.f32.mrf.mxu0
    %v271 = vadd.f32 0.0, %v270
    %v272 = vpop.f32.mrf.mxu0
    %v273 = vpop.f32.mrf.mxu0
    %v274 = vadd.f32 0.0, %v273
    %v275 = vpop.f32.mrf.mxu0
    %276 = vmatprep.mubr.bf16.mxu0 0
    %277 = vmatmul.mubr.bf16.gmra.mxu0 %v145
    %v278 = vpop.f32.mrf.mxu0
    %v279 = vadd.f32 0.0, %v278
    %v280 = vpop.f32.mrf.mxu0
    %v281 = vpop.f32.mrf.mxu0
    %v282 = vadd.f32 0.0, %v281
    %v283 = vpop.f32.mrf.mxu0
    %284 = vmatprep.mubr.bf16.mxu0 0
    %285 = vmatmul.mubr.bf16.gmra.mxu0 %v146
    %v286 = vpop.f32.mrf.mxu0
    %v287 = vadd.f32 0.0, %v286
    %v288 = vpop.f32.mrf.mxu0
    %v289 = vpop.f32.mrf.mxu0
    %v290 = vadd.f32 0.0, %v289
    %v291 = vpop.f32.mrf.mxu0
    %292 = vmatprep.mubr.bf16.mxu0 0
    %293 = vmatmul.mubr.bf16.gmra.mxu0 %v147
    %v294 = vpop.f32.mrf.mxu0
    %v295 = vadd.f32 0.0, %v294
    %v296 = vpop.f32.mrf.mxu0
    %v297 = vpop.f32.mrf.mxu0
    %v298 = vadd.f32 0.0, %v297
    %v299 = vpop.f32.mrf.mxu0
    %300 = vdwg.mxu0
    %v301 = vpack.c.bf16 %v242, %v239
    %v302 = vpack.c.bf16 %v250, %v247
    %v303 = vpack.c.bf16 %v258, %v255
    %v304 = vpack.c.bf16 %v266, %v263
    %v305 = vpack.c.bf16 %v274, %v271
    %v306 = vpack.c.bf16 %v282, %v279
    %v307 = vpack.c.bf16 %v290, %v287
    %v308 = vpack.c.bf16 %v298, %v295
    %v309 = vld [vmem:[%s3] sm:$0x1]
    %v311 = vlaneseq
    %v312 = vshrl.u32 %v311, 7
    %v313 = vsub.s32 0, %v312
    %v314 = vrot.slane %v309, %v313
    %v332 = vunpack.c.l.b16 %v60
    %v333 = vunpack.c.l.b16 %v61
    %v334 = vunpack.c.l.b16 %v62
    %v335 = vunpack.c.l.b16 %v63
    %v336 = vunpack.c.l.b16 %v64
    %v337 = vunpack.c.l.b16 %v65
    %v338 = vunpack.c.l.b16 %v66
    %v339 = vunpack.c.l.b16 %v67
    %v340 = vunpack.c.l.b16 %v68
    %v341 = vunpack.c.l.b16 %v69
    %v342 = vunpack.c.l.b16 %v70
    %v343 = vunpack.c.l.b16 %v71
    %v344 = vunpack.c.l.b16 %v72
    %v345 = vunpack.c.l.b16 %v73
    %v346 = vunpack.c.l.b16 %v74
    %v347 = vunpack.c.l.b16 %v75
    %v348 = vpack.c.b16 %v333, %v332
    %v349 = vpack.c.b16 %v335, %v334
    %v350 = vpack.c.b16 %v337, %v336
    %v351 = vpack.c.b16 %v339, %v338
    %v352 = vpack.c.b16 %v341, %v340
    %v353 = vpack.c.b16 %v343, %v342
    %v354 = vpack.c.b16 %v345, %v344
    %v355 = vpack.c.b16 %v347, %v346
    %364 = vmatprep.subr.bf16.mxu0 0
    %365 = vmatpush1.bf16.msra.mxu0 %v308
    %366 = vmatprep.subr.bf16.mxu0 0
    %367 = vmatpush1.bf16.msra.mxu0 %v307
    %368 = vmatprep.subr.bf16.mxu0 0
    %369 = vmatpush1.bf16.msra.mxu0 %v306
    %370 = vmatprep.subr.bf16.mxu0 0
    %371 = vmatpush1.bf16.msra.mxu0 %v305
    %372 = vmatprep.subr.bf16.mxu0 0
    %373 = vmatpush1.bf16.msra.mxu0 %v304
    %374 = vmatprep.subr.bf16.mxu0 0
    %375 = vmatpush1.bf16.msra.mxu0 %v303
    %376 = vmatprep.subr.bf16.mxu0 0
    %377 = vmatpush1.bf16.msra.mxu0 %v302
    %378 = vmatprep.subr.bf16.mxu0 0
    %379 = vmatpush1.bf16.msra.mxu0 %v301
    %380 = vmatprep.subr.bf16.mxu0 0
    %381 = vmatpush2.bf16.msra.mxu0 0
    %382 = vmatprep.subr.bf16.mxu0 0
    %383 = vmatpush2.bf16.msra.mxu0 0
    %384 = vmatprep.subr.bf16.mxu0 0
    %385 = vmatpush2.bf16.msra.mxu0 0
    %386 = vmatprep.subr.bf16.mxu0 0
    %387 = vmatpush2.bf16.msra.mxu0 0
    %388 = vmatprep.subr.bf16.mxu0 0
    %389 = vmatpush2.bf16.msra.mxu0 0
    %390 = vmatprep.subr.bf16.mxu0 0
    %391 = vmatpush2.bf16.msra.mxu0 0
    %392 = vmatprep.subr.bf16.mxu0 0
    %393 = vmatpush2.bf16.msra.mxu0 0
    %394 = vmatprep.subr.bf16.mxu0 0
    %395 = vmatpush2.bf16.msra.mxu0 0
    %396 = vmatprep.mubr.bf16.mxu0 0
    %397 = vmatmul.mubr.bf16.gmra.mxu0 %v348
    %v398 = vpop.f32.mrf.mxu0
    %v399 = vadd.f32 %v314, %v398
    %v400 = vpop.f32.mrf.mxu0
    %v401 = vpop.f32.mrf.mxu0
    %v402 = vadd.f32 %v314, %v401
    %v403 = vpop.f32.mrf.mxu0
    %404 = vmatprep.mubr.bf16.mxu0 0
    %405 = vmatmul.mubr.bf16.gmra.mxu0 %v349
    %v406 = vpop.f32.mrf.mxu0
    %v407 = vadd.f32 %v314, %v406
    %v408 = vpop.f32.mrf.mxu0
    %v409 = vpop.f32.mrf.mxu0
    %v410 = vadd.f32 %v314, %v409
    %v411 = vpop.f32.mrf.mxu0
    %412 = vmatprep.mubr.bf16.mxu0 0
    %413 = vmatmul.mubr.bf16.gmra.mxu0 %v350
    %v414 = vpop.f32.mrf.mxu0
    %v415 = vadd.f32 %v314, %v414
    %v416 = vpop.f32.mrf.mxu0
    %v417 = vpop.f32.mrf.mxu0
    %v418 = vadd.f32 %v314, %v417
    %v419 = vpop.f32.mrf.mxu0
    %420 = vmatprep.mubr.bf16.mxu0 0
    %421 = vmatmul.mubr.bf16.gmra.mxu0 %v351
    %v422 = vpop.f32.mrf.mxu0
    %v423 = vadd.f32 %v314, %v422
    %v424 = vpop.f32.mrf.mxu0
    %v425 = vpop.f32.mrf.mxu0
    %v426 = vadd.f32 %v314, %v425
    %v427 = vpop.f32.mrf.mxu0
    %428 = vmatprep.mubr.bf16.mxu0 0
    %429 = vmatmul.mubr.bf16.gmra.mxu0 %v352
    %v430 = vpop.f32.mrf.mxu0
    %v431 = vadd.f32 %v314, %v430
    %v432 = vpop.f32.mrf.mxu0
    %v433 = vpop.f32.mrf.mxu0
    %v434 = vadd.f32 %v314, %v433
    %v435 = vpop.f32.mrf.mxu0
    %436 = vmatprep.mubr.bf16.mxu0 0
    %437 = vmatmul.mubr.bf16.gmra.mxu0 %v353
    %v438 = vpop.f32.mrf.mxu0
    %v439 = vadd.f32 %v314, %v438
    %v440 = vpop.f32.mrf.mxu0
    %v441 = vpop.f32.mrf.mxu0
    %v442 = vadd.f32 %v314, %v441
    %v443 = vpop.f32.mrf.mxu0
    %444 = vmatprep.mubr.bf16.mxu0 0
    %445 = vmatmul.mubr.bf16.gmra.mxu0 %v354
    %v446 = vpop.f32.mrf.mxu0
    %v447 = vadd.f32 %v314, %v446
    %v448 = vpop.f32.mrf.mxu0
    %v449 = vpop.f32.mrf.mxu0
    %v450 = vadd.f32 %v314, %v449
    %v451 = vpop.f32.mrf.mxu0
    %452 = vmatprep.mubr.bf16.mxu0 0
    %453 = vmatmul.mubr.bf16.gmra.mxu0 %v355
    %v454 = vpop.f32.mrf.mxu0
    %v455 = vadd.f32 %v314, %v454
    %v456 = vpop.f32.mrf.mxu0
    %v457 = vpop.f32.mrf.mxu0
    %v458 = vadd.f32 %v314, %v457
    %v459 = vpop.f32.mrf.mxu0
    %460 = vdwg.mxu0
    %v461 = vmax.f32 %v399, 0.0
    %v462 = vmax.f32 %v402, 0.0
    %v463 = vmax.f32 %v407, 0.0
    %v464 = vmax.f32 %v410, 0.0
    %v465 = vmax.f32 %v415, 0.0
    %v466 = vmax.f32 %v418, 0.0
    %v467 = vmax.f32 %v423, 0.0
    %v468 = vmax.f32 %v426, 0.0
    %v469 = vmax.f32 %v431, 0.0
    %v470 = vmax.f32 %v434, 0.0
    %v471 = vmax.f32 %v439, 0.0
    %v472 = vmax.f32 %v442, 0.0
    %v473 = vmax.f32 %v447, 0.0
    %v474 = vmax.f32 %v450, 0.0
    %v475 = vmax.f32 %v455, 0.0
    %v476 = vmax.f32 %v458, 0.0
    %v477 = vpack.c.bf16 %v462, %v461
    %v478 = vpack.c.bf16 %v464, %v463
    %v479 = vpack.c.bf16 %v466, %v465
    %v480 = vpack.c.bf16 %v468, %v467
    %v481 = vpack.c.bf16 %v470, %v469
    %v482 = vpack.c.bf16 %v472, %v471
    %v483 = vpack.c.bf16 %v474, %v473
    %v484 = vpack.c.bf16 %v476, %v475
    %s485 = scalar_lea.vmem [#allocation7], 64
    %v486 = vld [vmem:[%s485] sm:$0xf]
    %v487 = vld [vmem:[%s485 + $0x4] sm:$0xf]
    %v488 = vld [vmem:[%s485 + $0x8] sm:$0xf]
    %v489 = vld [vmem:[%s485 + $0xc] sm:$0xf]
    %v490 = vld [vmem:[%s485 + $0x10] sm:$0xf]
    %v491 = vld [vmem:[%s485 + $0x14] sm:$0xf]
    %v492 = vld [vmem:[%s485 + $0x18] sm:$0xf]
    %v493 = vld [vmem:[%s485 + $0x1c] sm:$0xf]
    %v494 = vld [vmem:[%s485 + $0x20] sm:$0xf]
    %v495 = vld [vmem:[%s485 + $0x24] sm:$0xf]
    %v496 = vld [vmem:[%s485 + $0x28] sm:$0xf]
    %v497 = vld [vmem:[%s485 + $0x2c] sm:$0xf]
    %v498 = vld [vmem:[%s485 + $0x30] sm:$0xf]
    %v499 = vld [vmem:[%s485 + $0x34] sm:$0xf]
    %v500 = vld [vmem:[%s485 + $0x38] sm:$0xf]
    %v501 = vld [vmem:[%s485 + $0x3c] sm:$0xf]
    %v518 = vunpack.c.l.b16 %v486
    %v519 = vunpack.c.l.b16 %v487
    %v520 = vunpack.c.l.b16 %v488
    %v521 = vunpack.c.l.b16 %v489
    %v522 = vunpack.c.l.b16 %v490
    %v523 = vunpack.c.l.b16 %v491
    %v524 = vunpack.c.l.b16 %v492
    %v525 = vunpack.c.l.b16 %v493
    %v526 = vunpack.c.l.b16 %v494
    %v527 = vunpack.c.l.b16 %v495
    %v528 = vunpack.c.l.b16 %v496
    %v529 = vunpack.c.l.b16 %v497
    %v530 = vunpack.c.l.b16 %v498
    %v531 = vunpack.c.l.b16 %v499
    %v532 = vunpack.c.l.b16 %v500
    %v533 = vunpack.c.l.b16 %v501
    %v534 = vpack.c.b16 %v519, %v518
    %v535 = vpack.c.b16 %v521, %v520
    %v536 = vpack.c.b16 %v523, %v522
    %v537 = vpack.c.b16 %v525, %v524
    %v538 = vpack.c.b16 %v527, %v526
    %v539 = vpack.c.b16 %v529, %v528
    %v540 = vpack.c.b16 %v531, %v530
    %v541 = vpack.c.b16 %v533, %v532
    %550 = vmatprep.subr.bf16.mxu0 0
    %551 = vmatpush1.bf16.msra.mxu0 %v541
    %552 = vmatprep.subr.bf16.mxu0 0
    %553 = vmatpush1.bf16.msra.mxu0 %v540
    %554 = vmatprep.subr.bf16.mxu0 0
    %555 = vmatpush1.bf16.msra.mxu0 %v539
    %556 = vmatprep.subr.bf16.mxu0 0
    %557 = vmatpush1.bf16.msra.mxu0 %v538
    %558 = vmatprep.subr.bf16.mxu0 0
    %559 = vmatpush1.bf16.msra.mxu0 %v537
    %560 = vmatprep.subr.bf16.mxu0 0
    %561 = vmatpush1.bf16.msra.mxu0 %v536
    %562 = vmatprep.subr.bf16.mxu0 0
    %563 = vmatpush1.bf16.msra.mxu0 %v535
    %564 = vmatprep.subr.bf16.mxu0 0
    %565 = vmatpush1.bf16.msra.mxu0 %v534
    %566 = vmatprep.subr.bf16.mxu0 0
    %567 = vmatpush2.bf16.msra.mxu0 0
    %568 = vmatprep.subr.bf16.mxu0 0
    %569 = vmatpush2.bf16.msra.mxu0 0
    %570 = vmatprep.subr.bf16.mxu0 0
    %571 = vmatpush2.bf16.msra.mxu0 0
    %572 = vmatprep.subr.bf16.mxu0 0
    %573 = vmatpush2.bf16.msra.mxu0 0
    %574 = vmatprep.subr.bf16.mxu0 0
    %575 = vmatpush2.bf16.msra.mxu0 0
    %576 = vmatprep.subr.bf16.mxu0 0
    %577 = vmatpush2.bf16.msra.mxu0 0
    %578 = vmatprep.subr.bf16.mxu0 0
    %579 = vmatpush2.bf16.msra.mxu0 0
    %580 = vmatprep.subr.bf16.mxu0 0
    %581 = vmatpush2.bf16.msra.mxu0 0
    %582 = vmatprep.mubr.bf16.mxu0 0
    %583 = vmatmul.mubr.bf16.gmra.mxu0 %v477
    %v584 = vpop.f32.mrf.mxu0
    %v585 = vadd.f32 0.0, %v584
    %v586 = vpop.f32.mrf.mxu0
    %v587 = vpop.f32.mrf.mxu0
    %v588 = vadd.f32 0.0, %v587
    %v589 = vpop.f32.mrf.mxu0
    %590 = vmatprep.mubr.bf16.mxu0 0
    %591 = vmatmul.mubr.bf16.gmra.mxu0 %v478
    %v592 = vpop.f32.mrf.mxu0
    %v593 = vadd.f32 0.0, %v592
    %v594 = vpop.f32.mrf.mxu0
    %v595 = vpop.f32.mrf.mxu0
    %v596 = vadd.f32 0.0, %v595
    %v597 = vpop.f32.mrf.mxu0
    %598 = vmatprep.mubr.bf16.mxu0 0
    %599 = vmatmul.mubr.bf16.gmra.mxu0 %v479
    %v600 = vpop.f32.mrf.mxu0
    %v601 = vadd.f32 0.0, %v600
    %v602 = vpop.f32.mrf.mxu0
    %v603 = vpop.f32.mrf.mxu0
    %v604 = vadd.f32 0.0, %v603
    %v605 = vpop.f32.mrf.mxu0
    %606 = vmatprep.mubr.bf16.mxu0 0
    %607 = vmatmul.mubr.bf16.gmra.mxu0 %v480
    %v608 = vpop.f32.mrf.mxu0
    %v609 = vadd.f32 0.0, %v608
    %v610 = vpop.f32.mrf.mxu0
    %v611 = vpop.f32.mrf.mxu0
    %v612 = vadd.f32 0.0, %v611
    %v613 = vpop.f32.mrf.mxu0
    %614 = vmatprep.mubr.bf16.mxu0 0
    %615 = vmatmul.mubr.bf16.gmra.mxu0 %v481
    %v616 = vpop.f32.mrf.mxu0
    %v617 = vadd.f32 0.0, %v616
    %v618 = vpop.f32.mrf.mxu0
    %v619 = vpop.f32.mrf.mxu0
    %v620 = vadd.f32 0.0, %v619
    %v621 = vpop.f32.mrf.mxu0
    %622 = vmatprep.mubr.bf16.mxu0 0
    %623 = vmatmul.mubr.bf16.gmra.mxu0 %v482
    %v624 = vpop.f32.mrf.mxu0
    %v625 = vadd.f32 0.0, %v624
    %v626 = vpop.f32.mrf.mxu0
    %v627 = vpop.f32.mrf.mxu0
    %v628 = vadd.f32 0.0, %v627
    %v629 = vpop.f32.mrf.mxu0
    %630 = vmatprep.mubr.bf16.mxu0 0
    %631 = vmatmul.mubr.bf16.gmra.mxu0 %v483
    %v632 = vpop.f32.mrf.mxu0
    %v633 = vadd.f32 0.0, %v632
    %v634 = vpop.f32.mrf.mxu0
    %v635 = vpop.f32.mrf.mxu0
    %v636 = vadd.f32 0.0, %v635
    %v637 = vpop.f32.mrf.mxu0
    %638 = vmatprep.mubr.bf16.mxu0 0
    %639 = vmatmul.mubr.bf16.gmra.mxu0 %v484
    %v640 = vpop.f32.mrf.mxu0
    %v641 = vadd.f32 0.0, %v640
    %v642 = vpop.f32.mrf.mxu0
    %v643 = vpop.f32.mrf.mxu0
    %v644 = vadd.f32 0.0, %v643
    %v645 = vpop.f32.mrf.mxu0
    %646 = vdwg.mxu0
    %v647 = vpack.c.bf16 %v588, %v585
    %v648 = vpack.c.bf16 %v596, %v593
    %v649 = vpack.c.bf16 %v604, %v601
    %v650 = vpack.c.bf16 %v612, %v609
    %v651 = vpack.c.bf16 %v620, %v617
    %v652 = vpack.c.bf16 %v628, %v625
    %v653 = vpack.c.bf16 %v636, %v633
    %v654 = vpack.c.bf16 %v644, %v641
    %s655 = scalar_lea.vmem %s3, 1
    %v656 = vld [vmem:[%s655] sm:$0x1]
    %v658 = vlaneseq
    %v659 = vshrl.u32 %v658, 7
    %v660 = vsub.s32 0, %v659
    %v661 = vrot.slane %v656, %v660
    %663 = vmatprep.subr.bf16.mxu0 0
    %664 = vmatpush1.bf16.msra.mxu0 %v654
    %665 = vmatprep.subr.bf16.mxu0 0
    %666 = vmatpush1.bf16.msra.mxu0 %v653
    %667 = vmatprep.subr.bf16.mxu0 0
    %668 = vmatpush1.bf16.msra.mxu0 %v652
    %669 = vmatprep.subr.bf16.mxu0 0
    %670 = vmatpush1.bf16.msra.mxu0 %v651
    %671 = vmatprep.subr.bf16.mxu0 0
    %672 = vmatpush1.bf16.msra.mxu0 %v650
    %673 = vmatprep.subr.bf16.mxu0 0
    %674 = vmatpush1.bf16.msra.mxu0 %v649
    %675 = vmatprep.subr.bf16.mxu0 0
    %676 = vmatpush1.bf16.msra.mxu0 %v648
    %677 = vmatprep.subr.bf16.mxu0 0
    %678 = vmatpush1.bf16.msra.mxu0 %v647
    %679 = vmatprep.subr.bf16.mxu0 0
    %680 = vmatpush2.bf16.msra.mxu0 0
    %681 = vmatprep.subr.bf16.mxu0 0
    %682 = vmatpush2.bf16.msra.mxu0 0
    %683 = vmatprep.subr.bf16.mxu0 0
    %684 = vmatpush2.bf16.msra.mxu0 0
    %685 = vmatprep.subr.bf16.mxu0 0
    %686 = vmatpush2.bf16.msra.mxu0 0
    %687 = vmatprep.subr.bf16.mxu0 0
    %688 = vmatpush2.bf16.msra.mxu0 0
    %689 = vmatprep.subr.bf16.mxu0 0
    %690 = vmatpush2.bf16.msra.mxu0 0
    %691 = vmatprep.subr.bf16.mxu0 0
    %692 = vmatpush2.bf16.msra.mxu0 0
    %693 = vmatprep.subr.bf16.mxu0 0
    %694 = vmatpush2.bf16.msra.mxu0 0
    %695 = vmatprep.mubr.bf16.mxu0 0
    %696 = vmatmul.mubr.bf16.gmra.mxu0 %v348
    %v697 = vpop.f32.mrf.mxu0
    %v698 = vadd.f32 %v661, %v697
    %v699 = vpop.f32.mrf.mxu0
    %v700 = vpop.f32.mrf.mxu0
    %v701 = vadd.f32 %v661, %v700
    %v702 = vpop.f32.mrf.mxu0
    %703 = vmatprep.mubr.bf16.mxu0 0
    %704 = vmatmul.mubr.bf16.gmra.mxu0 %v349
    %v705 = vpop.f32.mrf.mxu0
    %v706 = vadd.f32 %v661, %v705
    %v707 = vpop.f32.mrf.mxu0
    %v708 = vpop.f32.mrf.mxu0
    %v709 = vadd.f32 %v661, %v708
    %v710 = vpop.f32.mrf.mxu0
    %711 = vmatprep.mubr.bf16.mxu0 0
    %712 = vmatmul.mubr.bf16.gmra.mxu0 %v350
    %v713 = vpop.f32.mrf.mxu0
    %v714 = vadd.f32 %v661, %v713
    %v715 = vpop.f32.mrf.mxu0
    %v716 = vpop.f32.mrf.mxu0
    %v717 = vadd.f32 %v661, %v716
    %v718 = vpop.f32.mrf.mxu0
    %719 = vmatprep.mubr.bf16.mxu0 0
    %720 = vmatmul.mubr.bf16.gmra.mxu0 %v351
    %v721 = vpop.f32.mrf.mxu0
    %v722 = vadd.f32 %v661, %v721
    %v723 = vpop.f32.mrf.mxu0
    %v724 = vpop.f32.mrf.mxu0
    %v725 = vadd.f32 %v661, %v724
    %v726 = vpop.f32.mrf.mxu0
    %727 = vmatprep.mubr.bf16.mxu0 0
    %728 = vmatmul.mubr.bf16.gmra.mxu0 %v352
    %v729 = vpop.f32.mrf.mxu0
    %v730 = vadd.f32 %v661, %v729
    %v731 = vpop.f32.mrf.mxu0
    %v732 = vpop.f32.mrf.mxu0
    %v733 = vadd.f32 %v661, %v732
    %v734 = vpop.f32.mrf.mxu0
    %735 = vmatprep.mubr.bf16.mxu0 0
    %736 = vmatmul.mubr.bf16.gmra.mxu0 %v353
    %v737 = vpop.f32.mrf.mxu0
    %v738 = vadd.f32 %v661, %v737
    %v739 = vpop.f32.mrf.mxu0
    %v740 = vpop.f32.mrf.mxu0
    %v741 = vadd.f32 %v661, %v740
    %v742 = vpop.f32.mrf.mxu0
    %743 = vmatprep.mubr.bf16.mxu0 0
    %744 = vmatmul.mubr.bf16.gmra.mxu0 %v354
    %v745 = vpop.f32.mrf.mxu0
    %v746 = vadd.f32 %v661, %v745
    %v747 = vpop.f32.mrf.mxu0
    %v748 = vpop.f32.mrf.mxu0
    %v749 = vadd.f32 %v661, %v748
    %v750 = vpop.f32.mrf.mxu0
    %751 = vmatprep.mubr.bf16.mxu0 0
    %752 = vmatmul.mubr.bf16.gmra.mxu0 %v355
    %v753 = vpop.f32.mrf.mxu0
    %v754 = vadd.f32 %v661, %v753
    %v755 = vpop.f32.mrf.mxu0
    %v756 = vpop.f32.mrf.mxu0
    %v757 = vadd.f32 %v661, %v756
    %v758 = vpop.f32.mrf.mxu0
    %759 = vdwg.mxu0
    %v760 = vmax.f32 %v698, 0.0
    %v761 = vmax.f32 %v701, 0.0
    %v762 = vmax.f32 %v706, 0.0
    %v763 = vmax.f32 %v709, 0.0
    %v764 = vmax.f32 %v714, 0.0
    %v765 = vmax.f32 %v717, 0.0
    %v766 = vmax.f32 %v722, 0.0
    %v767 = vmax.f32 %v725, 0.0
    %v768 = vmax.f32 %v730, 0.0
    %v769 = vmax.f32 %v733, 0.0
    %v770 = vmax.f32 %v738, 0.0
    %v771 = vmax.f32 %v741, 0.0
    %v772 = vmax.f32 %v746, 0.0
    %v773 = vmax.f32 %v749, 0.0
    %v774 = vmax.f32 %v754, 0.0
    %v775 = vmax.f32 %v757, 0.0
    %v776 = vpack.c.bf16 %v761, %v760
    %v777 = vpack.c.bf16 %v763, %v762
    %v778 = vpack.c.bf16 %v765, %v764
    %v779 = vpack.c.bf16 %v767, %v766
    %v780 = vpack.c.bf16 %v769, %v768
    %v781 = vpack.c.bf16 %v771, %v770
    %v782 = vpack.c.bf16 %v773, %v772
    %v783 = vpack.c.bf16 %v775, %v774
    %s784 = scalar_lea.vmem [#allocation7], 128
    %v785 = vld [vmem:[%s784] sm:$0xf]
    %v786 = vld [vmem:[%s784 + $0x4] sm:$0xf]
    %v787 = vld [vmem:[%s784 + $0x8] sm:$0xf]
    %v788 = vld [vmem:[%s784 + $0xc] sm:$0xf]
    %v789 = vld [vmem:[%s784 + $0x10] sm:$0xf]
    %v790 = vld [vmem:[%s784 + $0x14] sm:$0xf]
    %v791 = vld [vmem:[%s784 + $0x18] sm:$0xf]
    %v792 = vld [vmem:[%s784 + $0x1c] sm:$0xf]
    %v793 = vld [vmem:[%s784 + $0x20] sm:$0xf]
    %v794 = vld [vmem:[%s784 + $0x24] sm:$0xf]
    %v795 = vld [vmem:[%s784 + $0x28] sm:$0xf]
    %v796 = vld [vmem:[%s784 + $0x2c] sm:$0xf]
    %v797 = vld [vmem:[%s784 + $0x30] sm:$0xf]
    %v798 = vld [vmem:[%s784 + $0x34] sm:$0xf]
    %v799 = vld [vmem:[%s784 + $0x38] sm:$0xf]
    %v800 = vld [vmem:[%s784 + $0x3c] sm:$0xf]
    %v817 = vunpack.c.l.b16 %v785
    %v818 = vunpack.c.l.b16 %v786
    %v819 = vunpack.c.l.b16 %v787
    %v820 = vunpack.c.l.b16 %v788
    %v821 = vunpack.c.l.b16 %v789
    %v822 = vunpack.c.l.b16 %v790
    %v823 = vunpack.c.l.b16 %v791
    %v824 = vunpack.c.l.b16 %v792
    %v825 = vunpack.c.l.b16 %v793
    %v826 = vunpack.c.l.b16 %v794
    %v827 = vunpack.c.l.b16 %v795
    %v828 = vunpack.c.l.b16 %v796
    %v829 = vunpack.c.l.b16 %v797
    %v830 = vunpack.c.l.b16 %v798
    %v831 = vunpack.c.l.b16 %v799
    %v832 = vunpack.c.l.b16 %v800
    %v833 = vpack.c.b16 %v818, %v817
    %v834 = vpack.c.b16 %v820, %v819
    %v835 = vpack.c.b16 %v822, %v821
    %v836 = vpack.c.b16 %v824, %v823
    %v837 = vpack.c.b16 %v826, %v825
    %v838 = vpack.c.b16 %v828, %v827
    %v839 = vpack.c.b16 %v830, %v829
    %v840 = vpack.c.b16 %v832, %v831
    %849 = vmatprep.subr.bf16.mxu0 0
    %850 = vmatpush1.bf16.msra.mxu0 %v840
    %851 = vmatprep.subr.bf16.mxu0 0
    %852 = vmatpush1.bf16.msra.mxu0 %v839
    %853 = vmatprep.subr.bf16.mxu0 0
    %854 = vmatpush1.bf16.msra.mxu0 %v838
    %855 = vmatprep.subr.bf16.mxu0 0
    %856 = vmatpush1.bf16.msra.mxu0 %v837
    %857 = vmatprep.subr.bf16.mxu0 0
    %858 = vmatpush1.bf16.msra.mxu0 %v836
    %859 = vmatprep.subr.bf16.mxu0 0
    %860 = vmatpush1.bf16.msra.mxu0 %v835
    %861 = vmatprep.subr.bf16.mxu0 0
    %862 = vmatpush1.bf16.msra.mxu0 %v834
    %863 = vmatprep.subr.bf16.mxu0 0
    %864 = vmatpush1.bf16.msra.mxu0 %v833
    %865 = vmatprep.subr.bf16.mxu0 0
    %866 = vmatpush2.bf16.msra.mxu0 0
    %867 = vmatprep.subr.bf16.mxu0 0
    %868 = vmatpush2.bf16.msra.mxu0 0
    %869 = vmatprep.subr.bf16.mxu0 0
    %870 = vmatpush2.bf16.msra.mxu0 0
    %871 = vmatprep.subr.bf16.mxu0 0
    %872 = vmatpush2.bf16.msra.mxu0 0
    %873 = vmatprep.subr.bf16.mxu0 0
    %874 = vmatpush2.bf16.msra.mxu0 0
    %875 = vmatprep.subr.bf16.mxu0 0
    %876 = vmatpush2.bf16.msra.mxu0 0
    %877 = vmatprep.subr.bf16.mxu0 0
    %878 = vmatpush2.bf16.msra.mxu0 0
    %879 = vmatprep.subr.bf16.mxu0 0
    %880 = vmatpush2.bf16.msra.mxu0 0
    %881 = vmatprep.mubr.bf16.mxu0 0
    %882 = vmatmul.mubr.bf16.gmra.mxu0 %v776
    %v883 = vpop.f32.mrf.mxu0
    %v884 = vadd.f32 0.0, %v883
    %v885 = vpop.f32.mrf.mxu0
    %v886 = vpop.f32.mrf.mxu0
    %v887 = vadd.f32 0.0, %v886
    %v888 = vpop.f32.mrf.mxu0
    %889 = vmatprep.mubr.bf16.mxu0 0
    %890 = vmatmul.mubr.bf16.gmra.mxu0 %v777
    %v891 = vpop.f32.mrf.mxu0
    %v892 = vadd.f32 0.0, %v891
    %v893 = vpop.f32.mrf.mxu0
    %v894 = vpop.f32.mrf.mxu0
    %v895 = vadd.f32 0.0, %v894
    %v896 = vpop.f32.mrf.mxu0
    %897 = vmatprep.mubr.bf16.mxu0 0
    %898 = vmatmul.mubr.bf16.gmra.mxu0 %v778
    %v899 = vpop.f32.mrf.mxu0
    %v900 = vadd.f32 0.0, %v899
    %v901 = vpop.f32.mrf.mxu0
    %v902 = vpop.f32.mrf.mxu0
    %v903 = vadd.f32 0.0, %v902
    %v904 = vpop.f32.mrf.mxu0
    %905 = vmatprep.mubr.bf16.mxu0 0
    %906 = vmatmul.mubr.bf16.gmra.mxu0 %v779
    %v907 = vpop.f32.mrf.mxu0
    %v908 = vadd.f32 0.0, %v907
    %v909 = vpop.f32.mrf.mxu0
    %v910 = vpop.f32.mrf.mxu0
    %v911 = vadd.f32 0.0, %v910
    %v912 = vpop.f32.mrf.mxu0
    %913 = vmatprep.mubr.bf16.mxu0 0
    %914 = vmatmul.mubr.bf16.gmra.mxu0 %v780
    %v915 = vpop.f32.mrf.mxu0
    %v916 = vadd.f32 0.0, %v915
    %v917 = vpop.f32.mrf.mxu0
    %v918 = vpop.f32.mrf.mxu0
    %v919 = vadd.f32 0.0, %v918
    %v920 = vpop.f32.mrf.mxu0
    %921 = vmatprep.mubr.bf16.mxu0 0
    %922 = vmatmul.mubr.bf16.gmra.mxu0 %v781
    %v923 = vpop.f32.mrf.mxu0
    %v924 = vadd.f32 0.0, %v923
    %v925 = vpop.f32.mrf.mxu0
    %v926 = vpop.f32.mrf.mxu0
    %v927 = vadd.f32 0.0, %v926
    %v928 = vpop.f32.mrf.mxu0
    %929 = vmatprep.mubr.bf16.mxu0 0
    %930 = vmatmul.mubr.bf16.gmra.mxu0 %v782
    %v931 = vpop.f32.mrf.mxu0
    %v932 = vadd.f32 0.0, %v931
    %v933 = vpop.f32.mrf.mxu0
    %v934 = vpop.f32.mrf.mxu0
    %v935 = vadd.f32 0.0, %v934
    %v936 = vpop.f32.mrf.mxu0
    %937 = vmatprep.mubr.bf16.mxu0 0
    %938 = vmatmul.mubr.bf16.gmra.mxu0 %v783
    %v939 = vpop.f32.mrf.mxu0
    %v940 = vadd.f32 0.0, %v939
    %v941 = vpop.f32.mrf.mxu0
    %v942 = vpop.f32.mrf.mxu0
    %v943 = vadd.f32 0.0, %v942
    %v944 = vpop.f32.mrf.mxu0
    %945 = vdwg.mxu0
    %v946 = vpack.c.bf16 %v887, %v884
    %v947 = vpack.c.bf16 %v895, %v892
    %v948 = vpack.c.bf16 %v903, %v900
    %v949 = vpack.c.bf16 %v911, %v908
    %v950 = vpack.c.bf16 %v919, %v916
    %v951 = vpack.c.bf16 %v927, %v924
    %v952 = vpack.c.bf16 %v935, %v932
    %v953 = vpack.c.bf16 %v943, %v940
    %s954 = scalar_lea.vmem %s3, 2
    %v955 = vld [vmem:[%s954] sm:$0x1]
    %v957 = vlaneseq
    %v958 = vshrl.u32 %v957, 7
    %v959 = vsub.s32 0, %v958
    %v960 = vrot.slane %v955, %v959
    %962 = vmatprep.subr.bf16.mxu0 0
    %963 = vmatpush1.bf16.msra.mxu0 %v953
    %964 = vmatprep.subr.bf16.mxu0 0
    %965 = vmatpush1.bf16.msra.mxu0 %v952
    %966 = vmatprep.subr.bf16.mxu0 0
    %967 = vmatpush1.bf16.msra.mxu0 %v951
    %968 = vmatprep.subr.bf16.mxu0 0
    %969 = vmatpush1.bf16.msra.mxu0 %v950
    %970 = vmatprep.subr.bf16.mxu0 0
    %971 = vmatpush1.bf16.msra.mxu0 %v949
    %972 = vmatprep.subr.bf16.mxu0 0
    %973 = vmatpush1.bf16.msra.mxu0 %v948
    %974 = vmatprep.subr.bf16.mxu0 0
    %975 = vmatpush1.bf16.msra.mxu0 %v947
    %976 = vmatprep.subr.bf16.mxu0 0
    %977 = vmatpush1.bf16.msra.mxu0 %v946
    %978 = vmatprep.subr.bf16.mxu0 0
    %979 = vmatpush2.bf16.msra.mxu0 0
    %980 = vmatprep.subr.bf16.mxu0 0
    %981 = vmatpush2.bf16.msra.mxu0 0
    %982 = vmatprep.subr.bf16.mxu0 0
    %983 = vmatpush2.bf16.msra.mxu0 0
    %984 = vmatprep.subr.bf16.mxu0 0
    %985 = vmatpush2.bf16.msra.mxu0 0
    %986 = vmatprep.subr.bf16.mxu0 0
    %987 = vmatpush2.bf16.msra.mxu0 0
    %988 = vmatprep.subr.bf16.mxu0 0
    %989 = vmatpush2.bf16.msra.mxu0 0
    %990 = vmatprep.subr.bf16.mxu0 0
    %991 = vmatpush2.bf16.msra.mxu0 0
    %992 = vmatprep.subr.bf16.mxu0 0
    %993 = vmatpush2.bf16.msra.mxu0 0
    %994 = vmatprep.mubr.bf16.mxu0 0
    %995 = vmatmul.mubr.bf16.gmra.mxu0 %v348
    %v996 = vpop.f32.mrf.mxu0
    %v997 = vadd.f32 %v960, %v996
    %v998 = vpop.f32.mrf.mxu0
    %v999 = vpop.f32.mrf.mxu0
    %v1000 = vadd.f32 %v960, %v999
    %v1001 = vpop.f32.mrf.mxu0
    %1002 = vmatprep.mubr.bf16.mxu0 0
    %1003 = vmatmul.mubr.bf16.gmra.mxu0 %v349
    %v1004 = vpop.f32.mrf.mxu0
    %v1005 = vadd.f32 %v960, %v1004
    %v1006 = vpop.f32.mrf.mxu0
    %v1007 = vpop.f32.mrf.mxu0
    %v1008 = vadd.f32 %v960, %v1007
    %v1009 = vpop.f32.mrf.mxu0
    %1010 = vmatprep.mubr.bf16.mxu0 0
    %1011 = vmatmul.mubr.bf16.gmra.mxu0 %v350
    %v1012 = vpop.f32.mrf.mxu0
    %v1013 = vadd.f32 %v960, %v1012
    %v1014 = vpop.f32.mrf.mxu0
    %v1015 = vpop.f32.mrf.mxu0
    %v1016 = vadd.f32 %v960, %v1015
    %v1017 = vpop.f32.mrf.mxu0
    %1018 = vmatprep.mubr.bf16.mxu0 0
    %1019 = vmatmul.mubr.bf16.gmra.mxu0 %v351
    %v1020 = vpop.f32.mrf.mxu0
    %v1021 = vadd.f32 %v960, %v1020
    %v1022 = vpop.f32.mrf.mxu0
    %v1023 = vpop.f32.mrf.mxu0
    %v1024 = vadd.f32 %v960, %v1023
    %v1025 = vpop.f32.mrf.mxu0
    %1026 = vmatprep.mubr.bf16.mxu0 0
    %1027 = vmatmul.mubr.bf16.gmra.mxu0 %v352
    %v1028 = vpop.f32.mrf.mxu0
    %v1029 = vadd.f32 %v960, %v1028
    %v1030 = vpop.f32.mrf.mxu0
    %v1031 = vpop.f32.mrf.mxu0
    %v1032 = vadd.f32 %v960, %v1031
    %v1033 = vpop.f32.mrf.mxu0
    %1034 = vmatprep.mubr.bf16.mxu0 0
    %1035 = vmatmul.mubr.bf16.gmra.mxu0 %v353
    %v1036 = vpop.f32.mrf.mxu0
    %v1037 = vadd.f32 %v960, %v1036
    %v1038 = vpop.f32.mrf.mxu0
    %v1039 = vpop.f32.mrf.mxu0
    %v1040 = vadd.f32 %v960, %v1039
    %v1041 = vpop.f32.mrf.mxu0
    %1042 = vmatprep.mubr.bf16.mxu0 0
    %1043 = vmatmul.mubr.bf16.gmra.mxu0 %v354
    %v1044 = vpop.f32.mrf.mxu0
    %v1045 = vadd.f32 %v960, %v1044
    %v1046 = vpop.f32.mrf.mxu0
    %v1047 = vpop.f32.mrf.mxu0
    %v1048 = vadd.f32 %v960, %v1047
    %v1049 = vpop.f32.mrf.mxu0
    %1050 = vmatprep.mubr.bf16.mxu0 0
    %1051 = vmatmul.mubr.bf16.gmra.mxu0 %v355
    %v1052 = vpop.f32.mrf.mxu0
    %v1053 = vadd.f32 %v960, %v1052
    %v1054 = vpop.f32.mrf.mxu0
    %v1055 = vpop.f32.mrf.mxu0
    %v1056 = vadd.f32 %v960, %v1055
    %v1057 = vpop.f32.mrf.mxu0
    %1058 = vdwg.mxu0
    %v1059 = vmax.f32 %v997, 0.0
    %v1060 = vmax.f32 %v1000, 0.0
    %v1061 = vmax.f32 %v1005, 0.0
    %v1062 = vmax.f32 %v1008, 0.0
    %v1063 = vmax.f32 %v1013, 0.0
    %v1064 = vmax.f32 %v1016, 0.0
    %v1065 = vmax.f32 %v1021, 0.0
    %v1066 = vmax.f32 %v1024, 0.0
    %v1067 = vmax.f32 %v1029, 0.0
    %v1068 = vmax.f32 %v1032, 0.0
    %v1069 = vmax.f32 %v1037, 0.0
    %v1070 = vmax.f32 %v1040, 0.0
    %v1071 = vmax.f32 %v1045, 0.0
    %v1072 = vmax.f32 %v1048, 0.0
    %v1073 = vmax.f32 %v1053, 0.0
    %v1074 = vmax.f32 %v1056, 0.0
    %v1075 = vpack.c.bf16 %v1060, %v1059
    %v1076 = vpack.c.bf16 %v1062, %v1061
    %v1077 = vpack.c.bf16 %v1064, %v1063
    %v1078 = vpack.c.bf16 %v1066, %v1065
    %v1079 = vpack.c.bf16 %v1068, %v1067
    %v1080 = vpack.c.bf16 %v1070, %v1069
    %v1081 = vpack.c.bf16 %v1072, %v1071
    %v1082 = vpack.c.bf16 %v1074, %v1073
    %s1083 = scalar_lea.vmem [#allocation7], 192
    %v1084 = vld [vmem:[%s1083] sm:$0xf]
    %v1085 = vld [vmem:[%s1083 + $0x4] sm:$0xf]
    %v1086 = vld [vmem:[%s1083 + $0x8] sm:$0xf]
    %v1087 = vld [vmem:[%s1083 + $0xc] sm:$0xf]
    %v1088 = vld [vmem:[%s1083 + $0x10] sm:$0xf]
    %v1089 = vld [vmem:[%s1083 + $0x14] sm:$0xf]
    %v1090 = vld [vmem:[%s1083 + $0x18] sm:$0xf]
    %v1091 = vld [vmem:[%s1083 + $0x1c] sm:$0xf]
    %v1092 = vld [vmem:[%s1083 + $0x20] sm:$0xf]
    %v1093 = vld [vmem:[%s1083 + $0x24] sm:$0xf]
    %v1094 = vld [vmem:[%s1083 + $0x28] sm:$0xf]
    %v1095 = vld [vmem:[%s1083 + $0x2c] sm:$0xf]
    %v1096 = vld [vmem:[%s1083 + $0x30] sm:$0xf]
    %v1097 = vld [vmem:[%s1083 + $0x34] sm:$0xf]
    %v1098 = vld [vmem:[%s1083 + $0x38] sm:$0xf]
    %v1099 = vld [vmem:[%s1083 + $0x3c] sm:$0xf]
    %v1116 = vunpack.c.l.b16 %v1084
    %v1117 = vunpack.c.l.b16 %v1085
    %v1118 = vunpack.c.l.b16 %v1086
    %v1119 = vunpack.c.l.b16 %v1087
    %v1120 = vunpack.c.l.b16 %v1088
    %v1121 = vunpack.c.l.b16 %v1089
    %v1122 = vunpack.c.l.b16 %v1090
    %v1123 = vunpack.c.l.b16 %v1091
    %v1124 = vunpack.c.l.b16 %v1092
    %v1125 = vunpack.c.l.b16 %v1093
    %v1126 = vunpack.c.l.b16 %v1094
    %v1127 = vunpack.c.l.b16 %v1095
    %v1128 = vunpack.c.l.b16 %v1096
    %v1129 = vunpack.c.l.b16 %v1097
    %v1130 = vunpack.c.l.b16 %v1098
    %v1131 = vunpack.c.l.b16 %v1099
    %v1132 = vpack.c.b16 %v1117, %v1116
    %v1133 = vpack.c.b16 %v1119, %v1118
    %v1134 = vpack.c.b16 %v1121, %v1120
    %v1135 = vpack.c.b16 %v1123, %v1122
    %v1136 = vpack.c.b16 %v1125, %v1124
    %v1137 = vpack.c.b16 %v1127, %v1126
    %v1138 = vpack.c.b16 %v1129, %v1128
    %v1139 = vpack.c.b16 %v1131, %v1130
    %1148 = vmatprep.subr.bf16.mxu0 0
    %1149 = vmatpush1.bf16.msra.mxu0 %v1139
    %1150 = vmatprep.subr.bf16.mxu0 0
    %1151 = vmatpush1.bf16.msra.mxu0 %v1138
    %1152 = vmatprep.subr.bf16.mxu0 0
    %1153 = vmatpush1.bf16.msra.mxu0 %v1137
    %1154 = vmatprep.subr.bf16.mxu0 0
    %1155 = vmatpush1.bf16.msra.mxu0 %v1136
    %1156 = vmatprep.subr.bf16.mxu0 0
    %1157 = vmatpush1.bf16.msra.mxu0 %v1135
    %1158 = vmatprep.subr.bf16.mxu0 0
    %1159 = vmatpush1.bf16.msra.mxu0 %v1134
    %1160 = vmatprep.subr.bf16.mxu0 0
    %1161 = vmatpush1.bf16.msra.mxu0 %v1133
    %1162 = vmatprep.subr.bf16.mxu0 0
    %1163 = vmatpush1.bf16.msra.mxu0 %v1132
    %1164 = vmatprep.subr.bf16.mxu0 0
    %1165 = vmatpush2.bf16.msra.mxu0 0
    %1166 = vmatprep.subr.bf16.mxu0 0
    %1167 = vmatpush2.bf16.msra.mxu0 0
    %1168 = vmatprep.subr.bf16.mxu0 0
    %1169 = vmatpush2.bf16.msra.mxu0 0
    %1170 = vmatprep.subr.bf16.mxu0 0
    %1171 = vmatpush2.bf16.msra.mxu0 0
    %1172 = vmatprep.subr.bf16.mxu0 0
    %1173 = vmatpush2.bf16.msra.mxu0 0
    %1174 = vmatprep.subr.bf16.mxu0 0
    %1175 = vmatpush2.bf16.msra.mxu0 0
    %1176 = vmatprep.subr.bf16.mxu0 0
    %1177 = vmatpush2.bf16.msra.mxu0 0
    %1178 = vmatprep.subr.bf16.mxu0 0
    %1179 = vmatpush2.bf16.msra.mxu0 0
    %1180 = vmatprep.mubr.bf16.mxu0 0
    %1181 = vmatmul.mubr.bf16.gmra.mxu0 %v1075
    %v1182 = vpop.f32.mrf.mxu0
    %v1183 = vadd.f32 0.0, %v1182
    %v1184 = vpop.f32.mrf.mxu0
    %v1185 = vpop.f32.mrf.mxu0
    %v1186 = vadd.f32 0.0, %v1185
    %v1187 = vpop.f32.mrf.mxu0
    %1188 = vmatprep.mubr.bf16.mxu0 0
    %1189 = vmatmul.mubr.bf16.gmra.mxu0 %v1076
    %v1190 = vpop.f32.mrf.mxu0
    %v1191 = vadd.f32 0.0, %v1190
    %v1192 = vpop.f32.mrf.mxu0
    %v1193 = vpop.f32.mrf.mxu0
    %v1194 = vadd.f32 0.0, %v1193
    %v1195 = vpop.f32.mrf.mxu0
    %1196 = vmatprep.mubr.bf16.mxu0 0
    %1197 = vmatmul.mubr.bf16.gmra.mxu0 %v1077
    %v1198 = vpop.f32.mrf.mxu0
    %v1199 = vadd.f32 0.0, %v1198
    %v1200 = vpop.f32.mrf.mxu0
    %v1201 = vpop.f32.mrf.mxu0
    %v1202 = vadd.f32 0.0, %v1201
    %v1203 = vpop.f32.mrf.mxu0
    %1204 = vmatprep.mubr.bf16.mxu0 0
    %1205 = vmatmul.mubr.bf16.gmra.mxu0 %v1078
    %v1206 = vpop.f32.mrf.mxu0
    %v1207 = vadd.f32 0.0, %v1206
    %v1208 = vpop.f32.mrf.mxu0
    %v1209 = vpop.f32.mrf.mxu0
    %v1210 = vadd.f32 0.0, %v1209
    %v1211 = vpop.f32.mrf.mxu0
    %1212 = vmatprep.mubr.bf16.mxu0 0
    %1213 = vmatmul.mubr.bf16.gmra.mxu0 %v1079
    %v1214 = vpop.f32.mrf.mxu0
    %v1215 = vadd.f32 0.0, %v1214
    %v1216 = vpop.f32.mrf.mxu0
    %v1217 = vpop.f32.mrf.mxu0
    %v1218 = vadd.f32 0.0, %v1217
    %v1219 = vpop.f32.mrf.mxu0
    %1220 = vmatprep.mubr.bf16.mxu0 0
    %1221 = vmatmul.mubr.bf16.gmra.mxu0 %v1080
    %v1222 = vpop.f32.mrf.mxu0
    %v1223 = vadd.f32 0.0, %v1222
    %v1224 = vpop.f32.mrf.mxu0
    %v1225 = vpop.f32.mrf.mxu0
    %v1226 = vadd.f32 0.0, %v1225
    %v1227 = vpop.f32.mrf.mxu0
    %1228 = vmatprep.mubr.bf16.mxu0 0
    %1229 = vmatmul.mubr.bf16.gmra.mxu0 %v1081
    %v1230 = vpop.f32.mrf.mxu0
    %v1231 = vadd.f32 0.0, %v1230
    %v1232 = vpop.f32.mrf.mxu0
    %v1233 = vpop.f32.mrf.mxu0
    %v1234 = vadd.f32 0.0, %v1233
    %v1235 = vpop.f32.mrf.mxu0
    %1236 = vmatprep.mubr.bf16.mxu0 0
    %1237 = vmatmul.mubr.bf16.gmra.mxu0 %v1082
    %v1238 = vpop.f32.mrf.mxu0
    %v1239 = vadd.f32 0.0, %v1238
    %v1240 = vpop.f32.mrf.mxu0
    %v1241 = vpop.f32.mrf.mxu0
    %v1242 = vadd.f32 0.0, %v1241
    %v1243 = vpop.f32.mrf.mxu0
    %1244 = vdwg.mxu0
    %v1245 = vpack.c.bf16 %v1186, %v1183
    %v1246 = vpack.c.bf16 %v1194, %v1191
    %v1247 = vpack.c.bf16 %v1202, %v1199
    %v1248 = vpack.c.bf16 %v1210, %v1207
    %v1249 = vpack.c.bf16 %v1218, %v1215
    %v1250 = vpack.c.bf16 %v1226, %v1223
    %v1251 = vpack.c.bf16 %v1234, %v1231
    %v1252 = vpack.c.bf16 %v1242, %v1239
    %s1253 = scalar_lea.vmem %s3, 3
    %v1254 = vld [vmem:[%s1253] sm:$0x1]
    %v1256 = vlaneseq
    %v1257 = vshrl.u32 %v1256, 7
    %v1258 = vsub.s32 0, %v1257
    %v1259 = vrot.slane %v1254, %v1258
    %1261 = vmatprep.subr.bf16.mxu0 0
    %1262 = vmatpush1.bf16.msra.mxu0 %v1252
    %1263 = vmatprep.subr.bf16.mxu0 0
    %1264 = vmatpush1.bf16.msra.mxu0 %v1251
    %1265 = vmatprep.subr.bf16.mxu0 0
    %1266 = vmatpush1.bf16.msra.mxu0 %v1250
    %1267 = vmatprep.subr.bf16.mxu0 0
    %1268 = vmatpush1.bf16.msra.mxu0 %v1249
    %1269 = vmatprep.subr.bf16.mxu0 0
    %1270 = vmatpush1.bf16.msra.mxu0 %v1248
    %1271 = vmatprep.subr.bf16.mxu0 0
    %1272 = vmatpush1.bf16.msra.mxu0 %v1247
    %1273 = vmatprep.subr.bf16.mxu0 0
    %1274 = vmatpush1.bf16.msra.mxu0 %v1246
    %1275 = vmatprep.subr.bf16.mxu0 0
    %1276 = vmatpush1.bf16.msra.mxu0 %v1245
    %1277 = vmatprep.subr.bf16.mxu0 0
    %1278 = vmatpush2.bf16.msra.mxu0 0
    %1279 = vmatprep.subr.bf16.mxu0 0
    %1280 = vmatpush2.bf16.msra.mxu0 0
    %1281 = vmatprep.subr.bf16.mxu0 0
    %1282 = vmatpush2.bf16.msra.mxu0 0
    %1283 = vmatprep.subr.bf16.mxu0 0
    %1284 = vmatpush2.bf16.msra.mxu0 0
    %1285 = vmatprep.subr.bf16.mxu0 0
    %1286 = vmatpush2.bf16.msra.mxu0 0
    %1287 = vmatprep.subr.bf16.mxu0 0
    %1288 = vmatpush2.bf16.msra.mxu0 0
    %1289 = vmatprep.subr.bf16.mxu0 0
    %1290 = vmatpush2.bf16.msra.mxu0 0
    %1291 = vmatprep.subr.bf16.mxu0 0
    %1292 = vmatpush2.bf16.msra.mxu0 0
    %1293 = vmatprep.mubr.bf16.mxu0 0
    %1294 = vmatmul.mubr.bf16.gmra.mxu0 %v348
    %v1295 = vpop.f32.mrf.mxu0
    %v1296 = vadd.f32 %v1259, %v1295
    %v1297 = vpop.f32.mrf.mxu0
    %v1298 = vpop.f32.mrf.mxu0
    %v1299 = vadd.f32 %v1259, %v1298
    %v1300 = vpop.f32.mrf.mxu0
    %1301 = vmatprep.mubr.bf16.mxu0 0
    %1302 = vmatmul.mubr.bf16.gmra.mxu0 %v349
    %v1303 = vpop.f32.mrf.mxu0
    %v1304 = vadd.f32 %v1259, %v1303
    %v1305 = vpop.f32.mrf.mxu0
    %v1306 = vpop.f32.mrf.mxu0
    %v1307 = vadd.f32 %v1259, %v1306
    %v1308 = vpop.f32.mrf.mxu0
    %1309 = vmatprep.mubr.bf16.mxu0 0
    %1310 = vmatmul.mubr.bf16.gmra.mxu0 %v350
    %v1311 = vpop.f32.mrf.mxu0
    %v1312 = vadd.f32 %v1259, %v1311
    %v1313 = vpop.f32.mrf.mxu0
    %v1314 = vpop.f32.mrf.mxu0
    %v1315 = vadd.f32 %v1259, %v1314
    %v1316 = vpop.f32.mrf.mxu0
    %1317 = vmatprep.mubr.bf16.mxu0 0
    %1318 = vmatmul.mubr.bf16.gmra.mxu0 %v351
    %v1319 = vpop.f32.mrf.mxu0
    %v1320 = vadd.f32 %v1259, %v1319
    %v1321 = vpop.f32.mrf.mxu0
    %v1322 = vpop.f32.mrf.mxu0
    %v1323 = vadd.f32 %v1259, %v1322
    %v1324 = vpop.f32.mrf.mxu0
    %1325 = vmatprep.mubr.bf16.mxu0 0
    %1326 = vmatmul.mubr.bf16.gmra.mxu0 %v352
    %v1327 = vpop.f32.mrf.mxu0
    %v1328 = vadd.f32 %v1259, %v1327
    %v1329 = vpop.f32.mrf.mxu0
    %v1330 = vpop.f32.mrf.mxu0
    %v1331 = vadd.f32 %v1259, %v1330
    %v1332 = vpop.f32.mrf.mxu0
    %1333 = vmatprep.mubr.bf16.mxu0 0
    %1334 = vmatmul.mubr.bf16.gmra.mxu0 %v353
    %v1335 = vpop.f32.mrf.mxu0
    %v1336 = vadd.f32 %v1259, %v1335
    %v1337 = vpop.f32.mrf.mxu0
    %v1338 = vpop.f32.mrf.mxu0
    %v1339 = vadd.f32 %v1259, %v1338
    %v1340 = vpop.f32.mrf.mxu0
    %1341 = vmatprep.mubr.bf16.mxu0 0
    %1342 = vmatmul.mubr.bf16.gmra.mxu0 %v354
    %v1343 = vpop.f32.mrf.mxu0
    %v1344 = vadd.f32 %v1259, %v1343
    %v1345 = vpop.f32.mrf.mxu0
    %v1346 = vpop.f32.mrf.mxu0
    %v1347 = vadd.f32 %v1259, %v1346
    %v1348 = vpop.f32.mrf.mxu0
    %1349 = vmatprep.mubr.bf16.mxu0 0
    %1350 = vmatmul.mubr.bf16.gmra.mxu0 %v355
    %v1351 = vpop.f32.mrf.mxu0
    %v1352 = vadd.f32 %v1259, %v1351
    %v1353 = vpop.f32.mrf.mxu0
    %v1354 = vpop.f32.mrf.mxu0
    %v1355 = vadd.f32 %v1259, %v1354
    %v1356 = vpop.f32.mrf.mxu0
    %1357 = vdwg.mxu0
    %1358 = vst [vmem:[#allocation8] sm:$0xff] %v1296
    %1359 = vst [vmem:[#allocation8 + $0x8] sm:$0xff] %v1299
    %1360 = vst [vmem:[#allocation8 + $0x10] sm:$0xff] %v1304
    %1361 = vst [vmem:[#allocation8 + $0x18] sm:$0xff] %v1307
    %1362 = vst [vmem:[#allocation8 + $0x20] sm:$0xff] %v1312
    %1363 = vst [vmem:[#allocation8 + $0x28] sm:$0xff] %v1315
    %1364 = vst [vmem:[#allocation8 + $0x30] sm:$0xff] %v1320
    %1365 = vst [vmem:[#allocation8 + $0x38] sm:$0xff] %v1323
    %1366 = vst [vmem:[#allocation8 + $0x40] sm:$0xff] %v1328
    %1367 = vst [vmem:[#allocation8 + $0x48] sm:$0xff] %v1331
    %1368 = vst [vmem:[#allocation8 + $0x50] sm:$0xff] %v1336
    %1369 = vst [vmem:[#allocation8 + $0x58] sm:$0xff] %v1339
    %1370 = vst [vmem:[#allocation8 + $0x60] sm:$0xff] %v1344
    %1371 = vst [vmem:[#allocation8 + $0x68] sm:$0xff] %v1347
    %1372 = vst [vmem:[#allocation8 + $0x70] sm:$0xff] %v1352
    %1373 = vst [vmem:[#allocation8 + $0x78] sm:$0xff] %v1355
    // Predicated region
    $region30: #{tpu_custom_call.1} parent=1 // pred_check
      _
    $region31: #{tpu_custom_call.1} parent=1 // pred_check_branch
      %1375 = sbr.rel (0) target = $region33
    $region32: #{tpu_custom_call.1} parent=1 // pred_region
      %s1377 = ssub.s32 2048, 2048
      %1378 = vsyncadd [#allocation4], %s1377
      %s1379 = sshll.u32 [#allocation8], 4
      %s1380 = int_to_ptr.vmem [resolvable:$true] %s1379
      %1385 = dma.vmem_to_hbm [thread:$0]  %s1380, 2048, %s4, [#allocation4], 128, 128, 8
    $region33: #{tpu_custom_call.1} parent=1 // pred_fallthru
      _
    // Predicated region
    $region34: #{tpu_custom_call.1} parent=1 // pred_check
      _
    $region35: #{tpu_custom_call.1} parent=1 // pred_check_branch
      %1387 = sbr.rel (0) target = $region37
    $region36: #{tpu_custom_call.1} parent=1 // pred_region
      %1388 = dma.done [#allocation4], 2048
    $region37: #{tpu_custom_call.1} parent=1 // pred_fallthru
      _
    %1389 = vsyncpa [#allocation3], 1
    %1390 = vsyncpa [#allocation6], 1
    %1391 = vsyncpa [#allocation4], 1

</llo_original>
